<compile_context>
chip_gen: v5e
topology: v5e:2x2
jax: 0.10.0
libtpu: 0.0.40
codegen_flags: <defaults>
</compile_context>

<pallas_src>
import jax
import jax.numpy as jnp
from jax.experimental import pallas as pl
from jax.experimental.pallas import tpu as pltpu


_LANES = 512               # lane-dense block width (multiple of 128)
_MAX_BLOCK_ROWS = 512      # max rows per grid step; (512, 512) f32 = 1 MiB
_SMALL_K_FASTPATH = 65536  # below this, fused jnp beats a custom call


def _round_up(x, m):
    return (x + m - 1) // m * m


def _choose_block_rows(rows_pad):
    # Aim for >= 4 grid steps (pipeline overlap on all chips, 2-TC sharding on
    # v7x) while keeping blocks a multiple of 8 rows and <= _MAX_BLOCK_ROWS.
    target = _round_up(pl.cdiv(rows_pad, 4), 8)
    return max(8, min(_MAX_BLOCK_ROWS, target))


def _pad_to_slab(x, rows_pad, cols):
    """(K, 1) -> zero-padded (rows_pad, cols) lane-dense f32 slab."""
    flat = x.reshape(-1).astype(jnp.float32)
    flat = jnp.pad(flat, (0, rows_pad * cols - flat.shape[0]))
    return flat.reshape(rows_pad, cols)


def _rsample_kernel(mean_ref, scale_ref, eps_ref, out_ref):
    # Reparameterized sample: pure elementwise, memory-bound.
    out_ref[...] = mean_ref[...] + scale_ref[...] * eps_ref[...]


@jax.jit
def _rsample_pallas(mean2, scale2, eps2):
    rows_pad, cols = mean2.shape            # static under jit
    block_rows = _choose_block_rows(rows_pad)
    grid = (pl.cdiv(rows_pad, block_rows),)
    blk = pl.BlockSpec((block_rows, cols), lambda i: (i, 0))
    return pl.pallas_call(
        _rsample_kernel,
        out_shape=jax.ShapeDtypeStruct((rows_pad, cols), jnp.float32),
        grid=grid,
        in_specs=[blk, blk, blk],
        out_specs=blk,
        compiler_params=pltpu.CompilerParams(
            dimension_semantics=("parallel",),
        ),
    )(mean2, scale2, eps2)


@jax.jit
def _rsample_fused(mean, scale, eps):
    # Small-K fast path: single fused XLA expression.
    return mean + scale * eps


class IndependentGaussianJAX:
    """JAX/Pallas port of the PyTorch IndependentGaussian module."""

    def __init__(self, K, key):
        self.K = K
        init_key, self._key = jax.random.split(key)
        # Init matching torch:
        #   mean    = randn((K, 1))
        #   log_var = zeros((K, 1)) * log(0.01) == zeros((K, 1))
        self.set_params(
            jax.random.normal(init_key, (K, 1), dtype=jnp.float32),
            jnp.zeros((K, 1), dtype=jnp.float32),
        )

    def set_params(self, mean, log_var):
        """Install parameters; (re)builds the padded lane-dense slabs ONCE here,
        so forward() pays no per-call pad/reshape HBM traffic."""
        self.mean = mean.astype(jnp.float32)
        self.log_var = log_var.astype(jnp.float32)
        # NOTE: scale = 0.5 * exp(log_var) (NOT exp(0.5*log_var)) -- intentional,
        # it matches the PyTorch module; log_var is not a true log-variance here.
        self.scale = 0.5 * jnp.exp(self.log_var)
        rows_pad = _round_up(pl.cdiv(self.K, _LANES), 8)
        self._rows_pad = rows_pad
        self._mean2 = _pad_to_slab(self.mean, rows_pad, _LANES)
        self._scale2 = _pad_to_slab(self.scale, rows_pad, _LANES)

    def forward(self, seed=None, use_pallas=None):
        if seed is None:
            self._key, sub = jax.random.split(self._key)
        else:
            sub = jax.random.PRNGKey(seed)
        if use_pallas is None:
            use_pallas = self.K > _SMALL_K_FASTPATH

        if not use_pallas:
            eps = jax.random.normal(sub, (self.K, 1), dtype=jnp.float32)
            return _rsample_fused(self.mean, self.scale, eps)

        # eps is generated directly at the padded lane-dense shape: no pad copy.
        eps2 = jax.random.normal(sub, (self._rows_pad, _LANES), dtype=jnp.float32)
        out2 = _rsample_pallas(self._mean2, self._scale2, eps2)
        # The [:K] un-pad slice is a copy; callers that can consume the padded
        # (rows_pad, 512) slab should use out2 directly.
        return out2.reshape(-1)[: self.K].reshape(self.K, 1)

    def kl_divergence(self):
        # Closed-form KL(N(mean, scale) || N(0, 1)) summed -- tiny reduction,
        # plain jnp (a Pallas kernel would only add launch overhead here).
        # TODO(synk): not part of forward(); kept as plain jnp, not a kernel.
        var = self.scale ** 2
        kl = 0.5 * (var + self.mean ** 2 - 1.0) - jnp.log(self.scale)
        return jnp.sum(kl)


if __name__ == "__main__":
    K = 32
    key = jax.random.PRNGKey(0)
    module = IndependentGaussianJAX(K, key)

    # Force the Pallas path even at the module's tiny default K.
    sample = jax.block_until_ready(module.forward(seed=0, use_pallas=True))
    assert sample.shape == (K, 1)
    assert sample.dtype == jnp.float32

    # Determinism: same explicit seed -> identical sample.
    sample_again = jax.block_until_ready(module.forward(seed=0, use_pallas=True))
    assert bool(jnp.array_equal(sample, sample_again))

    # Exact correctness vs a plain-jnp reference built from the same eps slab.
    eps2_ref = jax.random.normal(jax.random.PRNGKey(0),
                                 (module._rows_pad, _LANES), dtype=jnp.float32)
    ref = (module._mean2 + module._scale2 * eps2_ref).reshape(-1)[:K].reshape(K, 1)
    assert bool(jnp.allclose(sample, ref, atol=1e-6, rtol=1e-6))

    # Fresh noise on successive seed-less forward() calls.
    sample_b = jax.block_until_ready(module.forward(use_pallas=True))
    sample_c = jax.block_until_ready(module.forward(use_pallas=True))
    assert not bool(jnp.array_equal(sample_b, sample_c))

    # Implied eps is finite and standard-normal-plausible.
    eps = (sample - module.mean) / module.scale
    assert bool(jnp.all(jnp.isfinite(eps)))
    assert bool(jnp.all(jnp.abs(eps) < 8.0))

    # Larger, non-aligned K: exercises padding hoist, the adaptive multi-block
    # grid (>= 4 steps) and the masked partial last block.  With mean=0,
    # log_var=0 the samples are N(0, 0.5^2).
    K_big = 100_003
    module_big = IndependentGaussianJAX(K_big, jax.random.PRNGKey(1))
    module_big.set_params(jnp.zeros((K_big, 1), jnp.float32),
                          jnp.zeros((K_big, 1), jnp.float32))
    s_big = jax.block_until_ready(module_big.forward(seed=123))  # auto-Pallas
    assert s_big.shape == (K_big, 1)
    m = float(jnp.mean(s_big))
    sd = float(jnp.std(s_big))
    assert abs(m) < 0.02, m            # sigma/sqrt(N) ~ 1.6e-3
    assert abs(sd - 0.5) < 0.02, sd    # scale = 0.5 * exp(0) = 0.5

    print("KERNEL_OK")
</pallas_src>

<mosaic_0001>
module attributes {stable_mosaic.version = 11 : i64} {
  func.func @_rsample_kernel(%arg0: i32, %arg1: memref<8x512xf32, #tpu.memory_space<vmem>>, %arg2: memref<8x512xf32, #tpu.memory_space<vmem>>, %arg3: memref<8x512xf32, #tpu.memory_space<vmem>>, %arg4: memref<8x512xf32, #tpu.memory_space<vmem>>) attributes {dimension_semantics = [#tpu.dimension_semantics<parallel>], iteration_bounds = array<i64: 1>, scalar_prefetch = 0 : i64, scratch_operands = 0 : i64, tpu.core_type = #tpu.core_type<tc>, window_params = [{transform_indices = @transform_0, window_bounds = array<i64: 8, 512>}, {transform_indices = @transform_1, window_bounds = array<i64: 8, 512>}, {transform_indices = @transform_2, window_bounds = array<i64: 8, 512>}, {transform_indices = @transform_3, window_bounds = array<i64: 8, 512>}]} {
    %c0 = arith.constant 0 : index
    %c0_0 = arith.constant 0 : index
    %0 = vector.load %arg1[%c0, %c0_0] : memref<8x512xf32, #tpu.memory_space<vmem>>, vector<8x512xf32>
    %c0_1 = arith.constant 0 : index
    %c0_2 = arith.constant 0 : index
    %1 = vector.load %arg2[%c0_1, %c0_2] : memref<8x512xf32, #tpu.memory_space<vmem>>, vector<8x512xf32>
    %c0_3 = arith.constant 0 : index
    %c0_4 = arith.constant 0 : index
    %2 = vector.load %arg3[%c0_3, %c0_4] : memref<8x512xf32, #tpu.memory_space<vmem>>, vector<8x512xf32>
    %3 = arith.mulf %1, %2 : vector<8x512xf32>
    %4 = arith.addf %0, %3 : vector<8x512xf32>
    %c0_5 = arith.constant 0 : index
    %c0_6 = arith.constant 0 : index
    %5 = vector.load %arg4[%c0_5, %c0_6] : memref<8x512xf32, #tpu.memory_space<vmem>>, vector<8x512xf32>
    tpu.vector_store %arg4[%c0_5, %c0_6], %4 {strides = array<i32>} : memref<8x512xf32, #tpu.memory_space<vmem>>, vector<8x512xf32>,
    return
  }
  func.func @transform_0(%arg0: i32) -> (i32, i32) {
    %c0_i32 = arith.constant 0 : i32
    %c0_i32_0 = arith.constant 0 : i32
    return %arg0, %c0_i32 : i32, i32
  }
  func.func @transform_1(%arg0: i32) -> (i32, i32) {
    %c0_i32 = arith.constant 0 : i32
    %c0_i32_0 = arith.constant 0 : i32
    return %arg0, %c0_i32 : i32, i32
  }
  func.func @transform_2(%arg0: i32) -> (i32, i32) {
    %c0_i32 = arith.constant 0 : i32
    %c0_i32_0 = arith.constant 0 : i32
    return %arg0, %c0_i32 : i32, i32
  }
  func.func @transform_3(%arg0: i32) -> (i32, i32) {
    %c0_i32 = arith.constant 0 : i32
    %c0_i32_0 = arith.constant 0 : i32
    return %arg0, %c0_i32 : i32, i32
  }
}

</mosaic_0001>

<llo_original>
// kernel: _rsample_pallas.1
$region0: #{_rsample_pallas.1}
  #allocation0 [shape = 'u32[]', space=smem, size = 0x4, offset = 0x4, fixed_abs, tag = 'smem constant byte address 0x4 - core index']
  #allocation1 [shape = 'u32[72,128]{1,0:T(1,128)}', space=vmem, size = 0x9000, scoped, tag = 'internal scratch']
  %s0 = inlined_call_operand.hbm [shape: f32[8,512], index: 0, kind: input, shape index: {}]
  %s1 = inlined_call_operand.hbm [shape: f32[8,512], index: 1, kind: input, shape index: {}]
  %s2 = inlined_call_operand.hbm [shape: f32[8,512], index: 2, kind: input, shape index: {}]
  %s3 = inlined_call_operand.hbm [shape: f32[8,512], index: 3, kind: output, shape index: {}]
  %s4 = sld [smem:[#allocation0]]
  $region34: #{_rsample_pallas.1} parent=0
    _
  %s6 = ssub.s32 1, %s4
  %s7 = scalar_select 0, %s6, %s4
  $region1: #{_rsample_pallas.1} parent=0
    #allocation2 [shape = 'u8[16384]{0}', space=vmem, size = 0x4000, scoped, tag = 'input window, operand 0, single buffered']
    #allocation3 [shape = 's32[1]{0}', space=sflag, size = 0x4, scoped, tag = 'scoped memory for _rsample_pallas.1']
    #allocation4 [shape = 's32[1]{0}', space=sflag, size = 0x4, scoped, tag = 'scoped memory for _rsample_pallas.1']
    #allocation5 [shape = 'u8[16384]{0}', space=vmem, size = 0x4000, scoped, tag = 'input window, operand 1, single buffered']
    #allocation6 [shape = 's32[1]{0}', space=sflag, size = 0x4, scoped, tag = 'scoped memory for _rsample_pallas.1']
    #allocation7 [shape = 'u8[16384]{0}', space=vmem, size = 0x4000, scoped, tag = 'input window, operand 2, single buffered']
    #allocation8 [shape = 'u8[16384]{0}', space=vmem, size = 0x4000, scoped, tag = 'output window, operand 0, single buffered']
    %8 = vsyncpa [#allocation3], 0
    %9 = vsyncpa [#allocation6], 0
    %10 = vsyncpa [#allocation4], 0
    // Predicated region
    $region2: #{_rsample_pallas.1} parent=1 // pred_check
      _
    $region3: #{_rsample_pallas.1} parent=1 // pred_check_branch
      %12 = sbr.rel (0) target = $region5
    $region4: #{_rsample_pallas.1} parent=1 // pred_region
      %14 = vsyncadd [#allocation3], 0
      %s16 = sshll.u32 %s0, 4
      %s17 = int_to_ptr.hbm [resolvable:$true] %s16
      %s18 = sshll.u32 [#allocation2], 4
      %s19 = int_to_ptr.vmem [resolvable:$true] %s18
      %21 = dma.hbm_to_vmem [thread:$0]  %s17, 512, %s19, [#allocation3]
    $region5: #{_rsample_pallas.1} parent=1 // pred_fallthru
      _
    // Predicated region
    $region6: #{_rsample_pallas.1} parent=1 // pred_check
      _
    $region7: #{_rsample_pallas.1} parent=1 // pred_check_branch
      %23 = sbr.rel (0) target = $region9
    $region8: #{_rsample_pallas.1} parent=1 // pred_region
      %25 = vsyncadd [#allocation6], 0
      %s27 = sshll.u32 %s1, 4
      %s28 = int_to_ptr.hbm [resolvable:$true] %s27
      %s29 = sshll.u32 [#allocation5], 4
      %s30 = int_to_ptr.vmem [resolvable:$true] %s29
      %32 = dma.hbm_to_vmem [thread:$0]  %s28, 512, %s30, [#allocation6]
    $region9: #{_rsample_pallas.1} parent=1 // pred_fallthru
      _
    // Predicated region
    $region10: #{_rsample_pallas.1} parent=1 // pred_check
      _
    $region11: #{_rsample_pallas.1} parent=1 // pred_check_branch
      %34 = sbr.rel (0) target = $region13
    $region12: #{_rsample_pallas.1} parent=1 // pred_region
      %36 = vsyncadd [#allocation6], 0
      %s38 = sshll.u32 %s2, 4
      %s39 = int_to_ptr.hbm [resolvable:$true] %s38
      %s40 = sshll.u32 [#allocation7], 4
      %s41 = int_to_ptr.vmem [resolvable:$true] %s40
      %43 = dma.hbm_to_vmem [thread:$0]  %s39, 512, %s41, [#allocation6]
    $region13: #{_rsample_pallas.1} parent=1 // pred_fallthru
      _
    // Predicated region
    $region14: #{_rsample_pallas.1} parent=1 // pred_check
      _
    $region15: #{_rsample_pallas.1} parent=1 // pred_check_branch
      %45 = sbr.rel (0) target = $region17
    $region16: #{_rsample_pallas.1} parent=1 // pred_region
      %47 = dma.done [#allocation3], 512
    $region17: #{_rsample_pallas.1} parent=1 // pred_fallthru
      _
    // Predicated region
    $region18: #{_rsample_pallas.1} parent=1 // pred_check
      _
    $region19: #{_rsample_pallas.1} parent=1 // pred_check_branch
      %49 = sbr.rel (0) target = $region21
    $region20: #{_rsample_pallas.1} parent=1 // pred_region
      %51 = dma.done [#allocation6], 512
    $region21: #{_rsample_pallas.1} parent=1 // pred_fallthru
      _
    // Predicated region
    $region22: #{_rsample_pallas.1} parent=1 // pred_check
      _
    $region23: #{_rsample_pallas.1} parent=1 // pred_check_branch
      %53 = sbr.rel (0) target = $region25
    $region24: #{_rsample_pallas.1} parent=1 // pred_region
      %55 = dma.done [#allocation6], 512
    $region25: #{_rsample_pallas.1} parent=1 // pred_fallthru
      _
    %v56 = vld [vmem:[#allocation2] sm:$0xff]
    %v57 = vld [vmem:[#allocation2 + $0x8] sm:$0xff]
    %v58 = vld [vmem:[#allocation2 + $0x10] sm:$0xff]
    %v59 = vld [vmem:[#allocation2 + $0x18] sm:$0xff]
    %v60 = vld [vmem:[#allocation5] sm:$0xff]
    %v61 = vld [vmem:[#allocation5 + $0x8] sm:$0xff]
    %v62 = vld [vmem:[#allocation5 + $0x10] sm:$0xff]
    %v63 = vld [vmem:[#allocation5 + $0x18] sm:$0xff]
    %v64 = vld [vmem:[#allocation7] sm:$0xff]
    %v65 = vld [vmem:[#allocation7 + $0x8] sm:$0xff]
    %v66 = vld [vmem:[#allocation7 + $0x10] sm:$0xff]
    %v67 = vld [vmem:[#allocation7 + $0x18] sm:$0xff]
    %v68 = vmul.f32 %v60, %v64
    %v69 = vmul.f32 %v61, %v65
    %v70 = vmul.f32 %v62, %v66
    %v71 = vmul.f32 %v63, %v67
    %v72 = vadd.f32 %v56, %v68
    %v73 = vadd.f32 %v57, %v69
    %v74 = vadd.f32 %v58, %v70
    %v75 = vadd.f32 %v59, %v71
    %76 = vst [vmem:[#allocation8] sm:$0xff] %v72
    %77 = vst [vmem:[#allocation8 + $0x8] sm:$0xff] %v73
    %78 = vst [vmem:[#allocation8 + $0x10] sm:$0xff] %v74
    %79 = vst [vmem:[#allocation8 + $0x18] sm:$0xff] %v75
    // Predicated region
    $region26: #{_rsample_pallas.1} parent=1 // pred_check
      _
    $region27: #{_rsample_pallas.1} parent=1 // pred_check_branch
      %81 = sbr.rel (0) target = $region29
    $region28: #{_rsample_pallas.1} parent=1 // pred_region
      %83 = vsyncadd [#allocation4], 0
      %s85 = sshll.u32 [#allocation8], 4
      %s86 = int_to_ptr.vmem [resolvable:$true] %s85
      %s87 = sshll.u32 %s3, 4
      %s88 = int_to_ptr.hbm [resolvable:$true] %s87
      %90 = dma.vmem_to_hbm [thread:$0]  %s86, 512, %s88, [#allocation4]
    $region29: #{_rsample_pallas.1} parent=1 // pred_fallthru
      _
    // Predicated region
    $region30: #{_rsample_pallas.1} parent=1 // pred_check
      _
    $region31: #{_rsample_pallas.1} parent=1 // pred_check_branch
      %92 = sbr.rel (0) target = $region33
    $region32: #{_rsample_pallas.1} parent=1 // pred_region
      %94 = dma.done [#allocation4], 512
    $region33: #{_rsample_pallas.1} parent=1 // pred_fallthru
      _
    %95 = vsyncpa [#allocation3], 1
    %96 = vsyncpa [#allocation6], 1
    %97 = vsyncpa [#allocation4], 1

</llo_original>
